<compile_context>
chip_gen: v5e
topology: v5e:2x2
jax: 0.10.0
libtpu: 0.0.40
codegen_flags: <defaults>
</compile_context>

<pallas_src>
import functools

import jax
import jax.numpy as jnp
from jax.experimental import pallas as pl
from jax.experimental.pallas import tpu as pltpu


def _focal_kernel(meta_ref, src_ref, dst_ref, score_ref, psum_ref, *,
                  alpha, gamma, edge_tile, lane_chunk):
    """Per-tile u_dot_v + sigmoid focal loss, edges-on-lanes layout.

    meta_ref  : SMEM (2,) int32  [e_pos, n_edges] (scalar prefetch)
    src_ref   : (D, edge_tile)   endpoint embeddings (edges on lanes)
    dst_ref   : (D, edge_tile)   endpoint embeddings (edges on lanes)
    score_ref : (1, edge_tile)   edge scores (lane dense)
    psum_ref  : (1, 128)         per-tile partial focal-loss sum (lane 0)
    """
    i = pl.program_id(0)
    e_pos = meta_ref[0]
    n_edges = meta_ref[1]
    n_chunks = edge_tile // lane_chunk

    # Hoisted out of the chunk loop (JAX does not CSE broadcasts).
    lane = jax.lax.broadcasted_iota(jnp.int32, (1, lane_chunk), 1)
    tile_base = i * edge_tile

    total = jnp.float32(0.0)
    # Static Python loop with static slices: keeps DMA tiles large while the
    # per-chunk working set (2 operands + product) stays within the vreg file.
    for j in range(n_chunks):
        off = j * lane_chunk
        src = src_ref[:, off:off + lane_chunk].astype(jnp.float32)
        dst = dst_ref[:, off:off + lane_chunk].astype(jnp.float32)

        # u_dot_v: reduce over the hidden dim (sublane axis) -> (1, lane_chunk).
        # Deliberately NOT an MXU matmul (M=1 would waste the systolic array).
        s = jnp.sum(src * dst, axis=0, keepdims=True)

        # Labels from the global edge position: first e_pos edges are positive.
        gidx = tile_base + off + lane
        pos_mask = gidx < e_pos
        y = pos_mask.astype(jnp.float32)

        # Numerically stable binary_cross_entropy_with_logits (reduction='none').
        bce = jnp.maximum(s, 0.0) - s * y + jnp.log1p(jnp.exp(-jnp.abs(s)))

        pt = jnp.exp(-bce)
        alpha_t = jnp.where(pos_mask, jnp.float32(alpha), jnp.float32(1.0 - alpha))

        base = 1.0 - pt                                  # always >= 0
        if gamma == 2.0:                                 # module default: 2 muls, no EUP
            mod = base * base
        elif float(gamma).is_integer() and gamma >= 0.0:
            mod = jax.lax.integer_pow(base, int(gamma))
        else:
            # generic pow with base==0 -> 0 (matches torch semantics)
            safe = jnp.where(base > 0.0, base, 1.0)
            mod = jnp.where(base > 0.0, jnp.exp(gamma * jnp.log(safe)), 0.0)

        f = alpha_t * mod * bce
        f = jnp.where(gidx < n_edges, f, 0.0)            # exclude padded tail

        score_ref[:, off:off + lane_chunk] = s.astype(score_ref.dtype)
        total = total + jnp.sum(f)

    lane128 = jax.lax.broadcasted_iota(jnp.int32, (1, 128), 1)
    psum_ref[...] = jnp.where(lane128 == 0, total, jnp.float32(0.0))


def focal_loss_pallas(embs, pos_src, pos_dst, neg_src, neg_dst,
                      alpha=0.25, gamma=2.0, edge_tile=None):
    """Returns (mean focal loss scalar, pos_score (Ep,1), neg_score (En,1))."""
    e_pos = int(pos_src.shape[0])
    e_neg = int(neg_src.shape[0])
    n_edges = e_pos + e_neg
    d = int(embs.shape[1])
    itemsize = int(jnp.dtype(embs.dtype).itemsize)

    # Lane-chunk: keep ~2 operand chunks within the 64 x 4 KiB vreg file.
    lane_chunk = max(128, min(512, ((16384 // max(d, 1)) // 128) * 128))

    if edge_tile is None:
        # ~2 MiB of input per operand per grid step, but no bigger than the
        # rounded edge count, and keep >= 4 grid steps when there is enough
        # work so the "parallel" axis can shard across 2 TensorCores (v7x).
        tgt = (2 * 1024 * 1024) // max(d * itemsize, 1)
        edge_tile = max(lane_chunk, min(8192, (tgt // lane_chunk) * lane_chunk))
        e_round = pl.cdiv(n_edges, lane_chunk) * lane_chunk
        edge_tile = min(edge_tile, e_round)
        if e_round >= 4 * lane_chunk:
            cap4 = ((e_round // 4) // lane_chunk) * lane_chunk
            edge_tile = min(edge_tile, max(lane_chunk, cap4))
    else:
        assert edge_tile % 128 == 0, "edge_tile must be a multiple of 128 (lane dim)"
    if edge_tile % lane_chunk:
        lane_chunk = 128
    lane_chunk = min(lane_chunk, edge_tile)

    # VMEM budget (v7x has only 64 MiB physical): 2 inputs x 2 pipeline buffers.
    while 4 * d * edge_tile * itemsize > (40 << 20) and edge_tile > lane_chunk:
        edge_tile = max(lane_chunk, ((edge_tile // 2) // lane_chunk) * lane_chunk)

    e_pad = pl.cdiv(n_edges, edge_tile) * edge_tile
    pad = e_pad - n_edges
    grid = (e_pad // edge_tile,)

    in_block = d * edge_tile * itemsize
    out_block = edge_tile * 4 + 128 * 4
    need = 2 * (2 * in_block) + 2 * out_block + (2 << 20)
    vmem_limit = int(min(max(32 << 20, 2 * need), 48 << 20))

    src_idx = jnp.concatenate([pos_src, neg_src]).astype(jnp.int32)
    dst_idx = jnp.concatenate([pos_dst, neg_dst]).astype(jnp.int32)
    if pad:
        src_idx = jnp.concatenate([src_idx, jnp.zeros((pad,), src_idx.dtype)])
        dst_idx = jnp.concatenate([dst_idx, jnp.zeros((pad,), dst_idx.dtype)])

    # Glue: data-dependent gather of endpoint embeddings (kept in the native
    # dtype -- bf16 halves the dominant HBM stream; the upcast is in-kernel).
    # TODO(synk): replace with an in-kernel VMEM-resident (D, N) table gather
    # (the remaining ~4*D x HBM-traffic win) once dynamic gather over arbitrary
    # table widths lowers reliably in Mosaic.
    embs_t = jnp.swapaxes(embs, 0, 1)                  # (D, N) -- N nodes only
    src_e = jnp.take(embs_t, src_idx, axis=1)          # (D, E_pad)
    dst_e = jnp.take(embs_t, dst_idx, axis=1)          # (D, E_pad)

    meta = jnp.array([e_pos, n_edges], dtype=jnp.int32)

    kernel = functools.partial(
        _focal_kernel, alpha=float(alpha), gamma=float(gamma),
        edge_tile=edge_tile, lane_chunk=lane_chunk)

    scores, psum = pl.pallas_call(
        kernel,
        out_shape=(
            jax.ShapeDtypeStruct((1, e_pad), jnp.float32),        # lane-dense scores
            jax.ShapeDtypeStruct((1, grid[0] * 128), jnp.float32)  # per-tile partial sums
        ),
        grid_spec=pltpu.PrefetchScalarGridSpec(
            num_scalar_prefetch=1,
            grid=grid,
            in_specs=[
                pl.BlockSpec((d, edge_tile), lambda i, m: (0, i)),
                pl.BlockSpec((d, edge_tile), lambda i, m: (0, i)),
            ],
            out_specs=[
                pl.BlockSpec((1, edge_tile), lambda i, m: (0, i)),
                pl.BlockSpec((1, 128), lambda i, m: (0, i)),
            ],
        ),
        compiler_params=pltpu.CompilerParams(
            dimension_semantics=("parallel",),          # independent tiles -> 2-TC on v7x
            vmem_limit_bytes=vmem_limit,
        ),
    )(meta, src_e, dst_e)

    # Tiny final reduction over per-tile partials (true edge count as divisor).
    loss = jnp.sum(psum) / jnp.float32(n_edges)
    pos_score = scores[0, :e_pos].reshape(e_pos, 1)
    neg_score = scores[0, e_pos:n_edges].reshape(e_neg, 1)
    return loss, pos_score, neg_score


def _focal_loss_ref(embs, pos_src, pos_dst, neg_src, neg_dst,
                    alpha=0.25, gamma=2.0):
    """Pure-JAX reference mirroring the PyTorch module (sigmoid logits, reduce)."""
    embs = embs.astype(jnp.float32)
    pos_score = jnp.sum(embs[pos_src] * embs[pos_dst], -1, keepdims=True)
    neg_score = jnp.sum(embs[neg_src] * embs[neg_dst], -1, keepdims=True)
    scores = jnp.concatenate([pos_score, neg_score])
    labels = jnp.concatenate([jnp.ones_like(pos_score), jnp.zeros_like(neg_score)])
    bce = jnp.maximum(scores, 0) - scores * labels + jnp.log1p(jnp.exp(-jnp.abs(scores)))
    pt = jnp.exp(-bce)
    alpha_t = labels * alpha + (1 - labels) * (1 - alpha)
    f = alpha_t * (1 - pt) ** gamma * bce
    return jnp.mean(f), pos_score, neg_score


if __name__ == "__main__":
    key = jax.random.PRNGKey(0)
    k_emb, k_ps, k_pd, k_ns, k_nd = jax.random.split(key, 5)

    N, D = 32, 32            # nodes, hidden dim
    E_POS, E_NEG = 192, 160  # positive / negative edges (352 total)

    embs = jax.random.normal(k_emb, (N, D), dtype=jnp.float32)
    pos_src = jax.random.randint(k_ps, (E_POS,), 0, N, dtype=jnp.int32)
    pos_dst = jax.random.randint(k_pd, (E_POS,), 0, N, dtype=jnp.int32)
    neg_src = jax.random.randint(k_ns, (E_NEG,), 0, N, dtype=jnp.int32)
    neg_dst = jax.random.randint(k_nd, (E_NEG,), 0, N, dtype=jnp.int32)

    ref_loss, ref_pos, ref_neg = _focal_loss_ref(
        embs, pos_src, pos_dst, neg_src, neg_dst)

    # Multi-tile path (3 tiles, label boundary inside a tile, padded tail).
    loss, pos_score, neg_score = jax.block_until_ready(
        focal_loss_pallas(embs, pos_src, pos_dst, neg_src, neg_dst,
                          edge_tile=128))
    assert jnp.allclose(loss, ref_loss, atol=1e-5, rtol=1e-5)
    assert jnp.allclose(pos_score, ref_pos, atol=1e-5, rtol=1e-5)
    assert jnp.allclose(neg_score, ref_neg, atol=1e-5, rtol=1e-5)

    # Auto-sized large-tile path (single lane-dense tile with padded tail).
    loss2, pos2, neg2 = jax.block_until_ready(
        focal_loss_pallas(embs, pos_src, pos_dst, neg_src, neg_dst))
    assert jnp.allclose(loss2, ref_loss, atol=1e-5, rtol=1e-5)
    assert jnp.allclose(pos2, ref_pos, atol=1e-5, rtol=1e-5)
    assert jnp.allclose(neg2, ref_neg, atol=1e-5, rtol=1e-5)

    # bf16 embedding stream (halved HBM traffic), f32 math in-kernel.
    embs_bf16 = embs.astype(jnp.bfloat16)
    ref_loss_b, ref_pos_b, ref_neg_b = _focal_loss_ref(
        embs_bf16, pos_src, pos_dst, neg_src, neg_dst)
    loss3, pos3, neg3 = jax.block_until_ready(
        focal_loss_pallas(embs_bf16, pos_src, pos_dst, neg_src, neg_dst))
    assert jnp.allclose(loss3, ref_loss_b, atol=1e-4, rtol=1e-4)
    assert jnp.allclose(pos3, ref_pos_b, atol=1e-4, rtol=1e-4)
    assert jnp.allclose(neg3, ref_neg_b, atol=1e-4, rtol=1e-4)

    print("KERNEL_OK")
</pallas_src>

<mosaic_0001>
module attributes {stable_mosaic.version = 11 : i64} {
  func.func @_focal_kernel(%arg0: i32, %arg1: memref<2xi32, #tpu.memory_space<smem>>, %arg2: memref<32x128xf32, #tpu.memory_space<vmem>>, %arg3: memref<32x128xf32, #tpu.memory_space<vmem>>, %arg4: memref<1x128xf32, #tpu.memory_space<vmem>>, %arg5: memref<1x128xf32, #tpu.memory_space<vmem>>) attributes {dimension_semantics = [#tpu.dimension_semantics<parallel>], iteration_bounds = array<i64: 3>, scalar_prefetch = 1 : i64, scratch_operands = 0 : i64, tpu.core_type = #tpu.core_type<tc>, window_params = [{transform_indices = @transform_0, window_bounds = array<i64: 32, 128>}, {transform_indices = @transform_1, window_bounds = array<i64: 32, 128>}, {transform_indices = @transform_2, window_bounds = array<i64: 1, 128>}, {transform_indices = @transform_3, window_bounds = array<i64: 1, 128>}]} {
    %c0 = arith.constant 0 : index
    %0 = memref.load %arg1[%c0] : memref<2xi32, #tpu.memory_space<smem>>
    %c1 = arith.constant 1 : index
    %1 = memref.load %arg1[%c1] : memref<2xi32, #tpu.memory_space<smem>>
    %2 = tpu.iota {dimensions = array<i32: 1>} : vector<1x128xi32>
    %c128_i32 = arith.constant 128 : i32
    %3 = arith.muli %arg0, %c128_i32 : i32
    %c0_0 = arith.constant 0 : index
    %c0_1 = arith.constant 0 : index
    %4 = vector.load %arg2[%c0_0, %c0_1] : memref<32x128xf32, #tpu.memory_space<vmem>>, vector<32x128xf32>
    %c0_2 = arith.constant 0 : index
    %c0_3 = arith.constant 0 : index
    %5 = vector.load %arg3[%c0_2, %c0_3] : memref<32x128xf32, #tpu.memory_space<vmem>>, vector<32x128xf32>
    %6 = arith.mulf %4, %5 : vector<32x128xf32>
    %cst = arith.constant dense<0.000000e+00> : vector<128xf32>
    %7 = vector.multi_reduction <add>, %6, %cst [0] : vector<32x128xf32> to vector<128xf32>
    %8 = vector.shape_cast %7 : vector<128xf32> to vector<1x128xf32>
    %c0_i32 = arith.constant 0 : i32
    %9 = arith.addi %3, %c0_i32 : i32
    %10 = vector.broadcast %9 : i32 to vector<1x128xi32>
    %11 = arith.addi %10, %2 : vector<1x128xi32>
    %12 = vector.broadcast %0 : i32 to vector<1x128xi32>
    %13 = arith.cmpi slt, %11, %12 : vector<1x128xi32>
    %14 = arith.extui %13 : vector<1x128xi1> to vector<1x128xi32>
    %15 = arith.sitofp %14 : vector<1x128xi32> to vector<1x128xf32>
    %cst_4 = arith.constant 0.000000e+00 : f32
    %16 = vector.broadcast %cst_4 : f32 to vector<1x128xf32>
    %17 = arith.maximumf %8, %16 : vector<1x128xf32>
    %18 = arith.mulf %8, %15 : vector<1x128xf32>
    %19 = arith.subf %17, %18 : vector<1x128xf32>
    %20 = math.absf %8 : vector<1x128xf32>
    %cst_5 = arith.constant 0.000000e+00 : f32
    %21 = vector.broadcast %cst_5 : f32 to vector<1x128xf32>
    %22 = arith.subf %21, %20 : vector<1x128xf32>
    %23 = math.exp %22 : vector<1x128xf32>
    %24 = math.log1p %23 : vector<1x128xf32>
    %25 = arith.addf %19, %24 : vector<1x128xf32>
    %cst_6 = arith.constant 0.000000e+00 : f32
    %26 = vector.broadcast %cst_6 : f32 to vector<1x128xf32>
    %27 = arith.subf %26, %25 : vector<1x128xf32>
    %28 = math.exp %27 : vector<1x128xf32>
    %cst_7 = arith.constant 2.500000e-01 : f32
    %cst_8 = arith.constant 7.500000e-01 : f32
    %29 = vector.broadcast %cst_7 : f32 to vector<1x128xf32>
    %30 = vector.broadcast %cst_8 : f32 to vector<1x128xf32>
    %31 = arith.select %13, %29, %30 : vector<1x128xi1>, vector<1x128xf32>
    %cst_9 = arith.constant 1.000000e+00 : f32
    %32 = vector.broadcast %cst_9 : f32 to vector<1x128xf32>
    %33 = arith.subf %32, %28 : vector<1x128xf32>
    %34 = arith.mulf %33, %33 : vector<1x128xf32>
    %35 = arith.mulf %31, %34 : vector<1x128xf32>
    %36 = arith.mulf %35, %25 : vector<1x128xf32>
    %37 = vector.broadcast %1 : i32 to vector<1x128xi32>
    %38 = arith.cmpi slt, %11, %37 : vector<1x128xi32>
    %cst_10 = arith.constant 0.000000e+00 : f32
    %39 = vector.broadcast %cst_10 : f32 to vector<1x128xf32>
    %40 = arith.select %38, %36, %39 : vector<1x128xi1>, vector<1x128xf32>
    %c0_11 = arith.constant 0 : index
    %c0_12 = arith.constant 0 : index
    %41 = vector.load %arg4[%c0_11, %c0_12] : memref<1x128xf32, #tpu.memory_space<vmem>>, vector<1x128xf32>
    tpu.vector_store %arg4[%c0_11, %c0_12], %8 {strides = array<i32>} : memref<1x128xf32, #tpu.memory_space<vmem>>, vector<1x128xf32>,
    %42 = vector.shape_cast %40 : vector<1x128xf32> to vector<1x1x128xf32>
    %cst_13 = arith.constant dense<0.000000e+00> : vector<1xf32>
    %43 = vector.multi_reduction <add>, %42, %cst_13 [1, 2] : vector<1x1x128xf32> to vector<1xf32>
    %44 = vector.shape_cast %43 : vector<1xf32> to vector<1x1x1xf32>
    %45 = vector.extract %44[0, 0, 0] : f32 from vector<1x1x1xf32>
    %cst_14 = arith.constant 0.000000e+00 : f32
    %46 = arith.addf %cst_14, %45 : f32
    %47 = tpu.iota {dimensions = array<i32: 1>} : vector<1x128xi32>
    %c0_i32_15 = arith.constant 0 : i32
    %48 = vector.broadcast %c0_i32_15 : i32 to vector<1x128xi32>
    %49 = arith.cmpi eq, %47, %48 : vector<1x128xi32>
    %cst_16 = arith.constant 0.000000e+00 : f32
    %50 = vector.broadcast %46 : f32 to vector<1x128xf32>
    %51 = vector.broadcast %cst_16 : f32 to vector<1x128xf32>
    %52 = arith.select %49, %50, %51 : vector<1x128xi1>, vector<1x128xf32>
    %c0_17 = arith.constant 0 : index
    %c0_18 = arith.constant 0 : index
    %53 = vector.load %arg5[%c0_17, %c0_18] : memref<1x128xf32, #tpu.memory_space<vmem>>, vector<1x128xf32>
    tpu.vector_store %arg5[%c0_17, %c0_18], %52 {strides = array<i32>} : memref<1x128xf32, #tpu.memory_space<vmem>>, vector<1x128xf32>,
    return
  }
  func.func @transform_0(%arg0: i32, %arg1: memref<2xi32, #tpu.memory_space<smem>>) -> (i32, i32) {
    %c0_i32 = arith.constant 0 : i32
    %c0_i32_0 = arith.constant 0 : i32
    return %c0_i32, %arg0 : i32, i32
  }
  func.func @transform_1(%arg0: i32, %arg1: memref<2xi32, #tpu.memory_space<smem>>) -> (i32, i32) {
    %c0_i32 = arith.constant 0 : i32
    %c0_i32_0 = arith.constant 0 : i32
    return %c0_i32, %arg0 : i32, i32
  }
  func.func @transform_2(%arg0: i32, %arg1: memref<2xi32, #tpu.memory_space<smem>>) -> (i32, i32) {
    %c0_i32 = arith.constant 0 : i32
    %c0_i32_0 = arith.constant 0 : i32
    return %c0_i32, %arg0 : i32, i32
  }
  func.func @transform_3(%arg0: i32, %arg1: memref<2xi32, #tpu.memory_space<smem>>) -> (i32, i32) {
    %c0_i32 = arith.constant 0 : i32
    %c0_i32_0 = arith.constant 0 : i32
    return %c0_i32, %arg0 : i32, i32
  }
}

</mosaic_0001>

<llo_original>
// kernel: tpu_custom_call.1
$region0: #{tpu_custom_call.1}
  #allocation0 [shape = 'u32[]', space=smem, size = 0x4, offset = 0x4, fixed_abs, tag = 'smem constant byte address 0x4 - core index']
  #allocation1 [shape = 'u32[72,128]{1,0:T(1,128)}', space=vmem, size = 0x9000, scoped, tag = 'internal scratch']
  #allocation2 [shape = 's32[1]{0}', space=sflag, size = 0x4, scoped, tag = 'scoped memory for tpu_custom_call.1']
  #allocation3 [shape = 'u8[512]{0}', space=smem, size = 0x200, scoped, tag = 'prefetched SMEM operand 0']
  %s0 = inlined_call_operand.hbm [shape: s32[2], index: 0, kind: input, shape index: {}]
  %s1 = inlined_call_operand.hbm [shape: f32[32,384], index: 1, kind: input, shape index: {}]
  %s2 = inlined_call_operand.hbm [shape: f32[32,384], index: 2, kind: input, shape index: {}]
  %s3 = inlined_call_operand.hbm [shape: f32[1,384], index: 3, kind: output, shape index: {0}]
  %s4 = inlined_call_operand.hbm [shape: f32[1,384], index: 4, kind: output, shape index: {1}]
  %5 = xla_tuple %s3, %s4
  %s6 = sld [smem:[#allocation0]]
  $region57: #{tpu_custom_call.1} parent=0
    _
  %s8 = ssub.s32 1, %s6
  %s9 = scalar_select 0, %s8, %s6
  %s11 = sshll.u32 %s0, 4
  %s12 = int_to_ptr.hbm [resolvable:$true] %s11
  %14 = dma.hbm_to_smem %s12, 16, [#allocation3], [#allocation2]
  %16 = dma.done [#allocation2], 16
  %17 = sfence
  $region1: #{tpu_custom_call.1} parent=0
    #allocation4 [shape = 'u8[32768]{0}', space=vmem, size = 0x8000, scoped, tag = 'input window, operand 1']
    #allocation5 [shape = 's32[2]{0}', space=sflag, size = 0x8, scoped, tag = 'scoped memory for tpu_custom_call.1']
    #allocation6 [shape = 's32[2]{0}', space=sflag, size = 0x8, scoped, tag = 'scoped memory for tpu_custom_call.1']
    #allocation7 [shape = 'u8[32768]{0}', space=vmem, size = 0x8000, scoped, tag = 'input window, operand 2']
    #allocation8 [shape = 's32[2]{0}', space=sflag, size = 0x8, scoped, tag = 'scoped memory for tpu_custom_call.1']
    #allocation9 [shape = 'u8[1024]{0}', space=vmem, size = 0x400, scoped, tag = 'output window, operand 0']
    #allocation10 [shape = 'u8[1024]{0}', space=vmem, size = 0x400, scoped, tag = 'output window, operand 1']
    #allocation11 [shape = 's32[2]{0}', space=sflag, size = 0x8, scoped, tag = 'scoped memory for tpu_custom_call.1']
    %18 = vsyncpa [#allocation5], 0
    %s19 = scalar_lea.sflag [#allocation5], 1
    %20 = vsyncpa %s19, 0
    %21 = vsyncpa [#allocation8], 0
    %s22 = scalar_lea.sflag [#allocation8], 1
    %23 = vsyncpa %s22, 0
    %24 = vsyncpa [#allocation6], 0
    %s25 = scalar_lea.sflag [#allocation6], 1
    %26 = vsyncpa %s25, 0
    %27 = vsyncpa [#allocation11], 0
    %s28 = scalar_lea.sflag [#allocation11], 1
    %29 = vsyncpa %s28, 0
    loop: start=0, step=1, limit=5
    $region2: #{tpu_custom_call.1} parent=1 // loop_pre_header
      _
    $region3: #{tpu_custom_call.1} parent=1 // loop_header
      %s31 = sphi 0, %s35
      %p32 = scmp.ge.s32.totalorder %s31, 5
      %s41 = sphi 0, %s43
      %s44 = sphi 0, %s41
      %s45 = sphi 0, %s44
      %s61 = sphi 0, %s45
      %s67 = sphi 0, %s69
      %s70 = sphi 0, %s67
      %s71 = sphi 0, %s70
      %s87 = sphi 0, %s71
      %s93 = sphi 0, %s95
      %s96 = sphi 0, %s93
      %s97 = sphi 0, %s96
      %s113 = sphi 0, %s97
      %s119 = sphi 0, %s121
      %s122 = sphi 0, %s119
      %s123 = sphi 0, %s122
      %s139 = sphi 0, %s123
    $region4: #{tpu_custom_call.1} parent=1 // loop_header_branch
      %34 = sbr.rel (%p32) target = $region8
    $region5: #{tpu_custom_call.1} parent=1 // loop_body
      %s36 = ssub.s32 %s31, 1
      %s37 = ssub.s32 %s31, 2
      %s38 = sadd.s32 %s31, 1
      %s39 = ssub.s32 %s31, %s38
      %p40 = scmp.eq.s32.totalorder %s39, 0
      %s42 = sadd.s32 %s41, 1
      %s43 = scalar_select %p40, %s41, %s42
      %p46 = pneg %p40
      %p47 = scmp.eq.s32.totalorder %s31, 2
      %p48 = por %p46, %p47
      %p49 = scmp.ne.s32.totalorder %s41, %s44
      %p50 = scmp.eq.s32.totalorder %s31, 0
      %p51 = por %p49, %p50
      %p52 = scmp.ne.s32.totalorder %s41, %s44
      %p53 = scmp.eq.s32.totalorder %s36, 2
      %p54 = por %p52, %p53
      %p55 = scmp.ne.s32.totalorder %s44, %s45
      %p56 = scmp.eq.s32.totalorder %s36, 0
      %p57 = por %p55, %p56
      %p58 = scmp.ne.s32.totalorder %s44, %s45
      %p59 = scmp.eq.s32.totalorder %s37, 2
      %p60 = por %p58, %p59
      %p62 = scmp.ne.s32.totalorder %s45, %s61
      %p63 = scmp.eq.s32.totalorder %s37, 0
      %p64 = por %p62, %p63
      %s65 = ssub.s32 %s31, %s38
      %p66 = scmp.eq.s32.totalorder %s65, 0
      %s68 = sadd.s32 %s67, 1
      %s69 = scalar_select %p66, %s67, %s68
      %p72 = pneg %p66
      %p73 = scmp.eq.s32.totalorder %s31, 2
      %p74 = por %p72, %p73
      %p75 = scmp.ne.s32.totalorder %s67, %s70
      %p76 = scmp.eq.s32.totalorder %s31, 0
      %p77 = por %p75, %p76
      %p78 = scmp.ne.s32.totalorder %s67, %s70
      %p79 = scmp.eq.s32.totalorder %s36, 2
      %p80 = por %p78, %p79
      %p81 = scmp.ne.s32.totalorder %s70, %s71
      %p82 = scmp.eq.s32.totalorder %s36, 0
      %p83 = por %p81, %p82
      %p84 = scmp.ne.s32.totalorder %s70, %s71
      %p85 = scmp.eq.s32.totalorder %s37, 2
      %p86 = por %p84, %p85
      %p88 = scmp.ne.s32.totalorder %s71, %s87
      %p89 = scmp.eq.s32.totalorder %s37, 0
      %p90 = por %p88, %p89
      %s91 = ssub.s32 %s31, %s38
      %p92 = scmp.eq.s32.totalorder %s91, 0
      %s94 = sadd.s32 %s93, 1
      %s95 = scalar_select %p92, %s93, %s94
      %p98 = pneg %p92
      %p99 = scmp.eq.s32.totalorder %s31, 2
      %p100 = por %p98, %p99
      %p101 = scmp.ne.s32.totalorder %s93, %s96
      %p102 = scmp.eq.s32.totalorder %s31, 0
      %p103 = por %p101, %p102
      %p104 = scmp.ne.s32.totalorder %s93, %s96
      %p105 = scmp.eq.s32.totalorder %s36, 2
      %p106 = por %p104, %p105
      %p107 = scmp.ne.s32.totalorder %s96, %s97
      %p108 = scmp.eq.s32.totalorder %s36, 0
      %p109 = por %p107, %p108
      %p110 = scmp.ne.s32.totalorder %s96, %s97
      %p111 = scmp.eq.s32.totalorder %s37, 2
      %p112 = por %p110, %p111
      %p114 = scmp.ne.s32.totalorder %s97, %s113
      %p115 = scmp.eq.s32.totalorder %s37, 0
      %p116 = por %p114, %p115
      %s117 = ssub.s32 %s31, %s38
      %p118 = scmp.eq.s32.totalorder %s117, 0
      %s120 = sadd.s32 %s119, 1
      %s121 = scalar_select %p118, %s119, %s120
      %p124 = pneg %p118
      %p125 = scmp.eq.s32.totalorder %s31, 2
      %p126 = por %p124, %p125
      %p127 = scmp.ne.s32.totalorder %s119, %s122
      %p128 = scmp.eq.s32.totalorder %s31, 0
      %p129 = por %p127, %p128
      %p130 = scmp.ne.s32.totalorder %s119, %s122
      %p131 = scmp.eq.s32.totalorder %s36, 2
      %p132 = por %p130, %p131
      %p133 = scmp.ne.s32.totalorder %s122, %s123
      %p134 = scmp.eq.s32.totalorder %s36, 0
      %p135 = por %p133, %p134
      %p136 = scmp.ne.s32.totalorder %s122, %s123
      %p137 = scmp.eq.s32.totalorder %s37, 2
      %p138 = por %p136, %p137
      %p140 = scmp.ne.s32.totalorder %s123, %s139
      %p141 = scmp.eq.s32.totalorder %s37, 0
      %p142 = por %p140, %p141
      %p143 = scmp.le.s32.totalorder 1, %s31
      %p144 = scmp.lt.s32.totalorder %s31, 4
      %p145 = pnand %p143, %p144
      %p146 = pneg %p145
      // Predicated region
      $region9: #{tpu_custom_call.1} parent=5 // pred_check
        _
      $region10: #{tpu_custom_call.1} parent=5 // pred_check_branch
        %148 = sbr.rel (%p145) target = $region12
      $region11: #{tpu_custom_call.1} parent=5 // pred_region
        %s149 = ssub.s32 %s31, 1
      $region12: #{tpu_custom_call.1} parent=5 // pred_fallthru
        _
      %p150 = scmp.lt.s32.totalorder %s31, 3
      // Predicated region
      $region13: #{tpu_custom_call.1} parent=5 // pred_check
        %p151 = pneg %p150
      $region14: #{tpu_custom_call.1} parent=5 // pred_check_branch
        %153 = sbr.rel (%p151) target = $region16
      $region15: #{tpu_custom_call.1} parent=5 // pred_region
        // Predicated region
        $region17: #{tpu_custom_call.1} parent=15 // pred_check
          %p154 = pneg %p51
        $region18: #{tpu_custom_call.1} parent=15 // pred_check_branch
          %156 = sbr.rel (%p154) target = $region20
        $region19: #{tpu_custom_call.1} parent=15 // pred_region
          %s157 = sand.u32 %s41, 1
          %s158 = scalar_lea.sflag [#allocation5], %s157
          %s159 = sand.u32 %s41, 1
          %s160 = smul.addr %s159, 32
          %s161 = scalar_lea.vmem [#allocation4], %s160
          %163 = vsyncadd %s158, 0
          %s164 = smul.addr %s31, 8
          %s165 = scalar_lea.hbm %s1, %s164
          %s166 = sshll.u32 %s165, 4
          %s167 = int_to_ptr.hbm [resolvable:$true] %s166
          %s168 = sshll.u32 %s161, 4
          %s169 = int_to_ptr.vmem [resolvable:$true] %s168
          %174 = dma.hbm_to_vmem [thread:$0]  %s167, 512, %s169, %s158, 384, 128, 8
        $region20: #{tpu_custom_call.1} parent=15 // pred_fallthru
          _
        // Predicated region
        $region21: #{tpu_custom_call.1} parent=15 // pred_check
          %p175 = pneg %p77
        $region22: #{tpu_custom_call.1} parent=15 // pred_check_branch
          %177 = sbr.rel (%p175) target = $region24
        $region23: #{tpu_custom_call.1} parent=15 // pred_region
          %s178 = sand.u32 %s67, 1
          %s179 = scalar_lea.sflag [#allocation8], %s178
          %s180 = sand.u32 %s67, 1
          %s181 = smul.addr %s180, 32
          %s182 = scalar_lea.vmem [#allocation7], %s181
          %184 = vsyncadd %s179, 0
          %s185 = smul.addr %s31, 8
          %s186 = scalar_lea.hbm %s2, %s185
          %s187 = sshll.u32 %s186, 4
          %s188 = int_to_ptr.hbm [resolvable:$true] %s187
          %s189 = sshll.u32 %s182, 4
          %s190 = int_to_ptr.vmem [resolvable:$true] %s189
          %195 = dma.hbm_to_vmem [thread:$0]  %s188, 512, %s190, %s179, 384, 128, 8
        $region24: #{tpu_custom_call.1} parent=15 // pred_fallthru
          _
      $region16: #{tpu_custom_call.1} parent=5 // pred_fallthru
        _
      %p196 = scmp.le.s32.totalorder 1, %s31
      %p197 = scmp.lt.s32.totalorder %s31, 4
      %p198 = pnand %p196, %p197
      %p199 = pneg %p198
      // Predicated region
      $region25: #{tpu_custom_call.1} parent=5 // pred_check
        _
      $region26: #{tpu_custom_call.1} parent=5 // pred_check_branch
        %201 = sbr.rel (%p198) target = $region28
      $region27: #{tpu_custom_call.1} parent=5 // pred_region
        %s202 = ssub.s32 %s31, 1
        %s203 = sand.u32 %s44, 1
        %s204 = scalar_lea.sflag [#allocation5], %s203
        %s205 = sand.u32 %s44, 1
        %s206 = smul.addr %s205, 32
        %s207 = scalar_lea.vmem [#allocation4], %s206
        // Predicated region
        $region29: #{tpu_custom_call.1} parent=27 // pred_check
          %p208 = pneg %p57
        $region30: #{tpu_custom_call.1} parent=27 // pred_check_branch
          %210 = sbr.rel (%p208) target = $region32
        $region31: #{tpu_custom_call.1} parent=27 // pred_region
          %212 = dma.done %s204, 512
        $region32: #{tpu_custom_call.1} parent=27 // pred_fallthru
          _
        %s213 = sand.u32 %s70, 1
        %s214 = scalar_lea.sflag [#allocation8], %s213
        %s215 = sand.u32 %s70, 1
        %s216 = smul.addr %s215, 32
        %s217 = scalar_lea.vmem [#allocation7], %s216
        // Predicated region
        $region33: #{tpu_custom_call.1} parent=27 // pred_check
          %p218 = pneg %p83
        $region34: #{tpu_custom_call.1} parent=27 // pred_check_branch
          %220 = sbr.rel (%p218) target = $region36
        $region35: #{tpu_custom_call.1} parent=27 // pred_region
          %222 = dma.done %s214, 512
        $region36: #{tpu_custom_call.1} parent=27 // pred_fallthru
          _
        %s223 = sand.u32 %s44, 1
        %s224 = scalar_lea.sflag [#allocation5], %s223
        %s225 = sand.u32 %s44, 1
        %s226 = smul.addr %s225, 32
        %s227 = scalar_lea.vmem [#allocation4], %s226
        %p228 = pneg %p57
        %p229 = pneg %p54
        %s230 = sand.u32 %s70, 1
        %s231 = scalar_lea.sflag [#allocation8], %s230
        %s232 = sand.u32 %s70, 1
        %s233 = smul.addr %s232, 32
        %s234 = scalar_lea.vmem [#allocation7], %s233
        %p235 = pneg %p83
        %p236 = pneg %p80
        %p237 = pneg %p109
        %p238 = pneg %p106
        %s239 = sand.u32 %s96, 1
        %s240 = scalar_lea.sflag [#allocation6], %s239
        %s241 = sand.u32 %s96, 1
        %s242 = scalar_lea.vmem [#allocation9], %s241
        %p243 = pneg %p135
        %p244 = pneg %p132
        %s245 = sand.u32 %s122, 1
        %s246 = scalar_lea.sflag [#allocation11], %s245
        %s247 = sand.u32 %s122, 1
        %s248 = scalar_lea.vmem [#allocation10], %s247
        %s249 = sld [smem:[#allocation3]]
        %s250 = sld [smem:[#allocation3 + $0x1]]
        %v251 = vlaneseq
        %v252 = vand.u32 %v251, 127
        %s253 = smul.u32 %s36, 128
        %v254 = vld [vmem:[%s207] sm:$0xff]
        %v255 = vld [vmem:[%s207 + $0x8] sm:$0xff]
        %v256 = vld [vmem:[%s207 + $0x10] sm:$0xff]
        %v257 = vld [vmem:[%s207 + $0x18] sm:$0xff]
        %v258 = vld [vmem:[%s217] sm:$0xff]
        %v259 = vld [vmem:[%s217 + $0x8] sm:$0xff]
        %v260 = vld [vmem:[%s217 + $0x10] sm:$0xff]
        %v261 = vld [vmem:[%s217 + $0x18] sm:$0xff]
        %v262 = vmul.f32 %v254, %v258
        %v263 = vmul.f32 %v255, %v259
        %v264 = vmul.f32 %v256, %v260
        %v265 = vmul.f32 %v257, %v261
        %v266 = vadd.f32 %v262, %v263
        %v267 = vadd.f32 %v266, %v264
        %v268 = vadd.f32 %v267, %v265
        %v269 = vrot.slane %v268, 4
        %v270 = vadd.f32 %v268, %v269
        %v271 = vrot.slane %v270, 2
        %v272 = vadd.f32 %v270, %v271
        %v273 = vrot.slane %v272, 1
        %v274 = vadd.f32 %v272, %v273
        %v275 = vstv %s253
        %v276 = vadd.s32 %v275, %v252
        %v277 = vstv %s249
        %vm278 = vcmp.lt.s32.totalorder %v276, %v277
        %v279 = vsel %vm278, 1, 0
        %v280 = vcvt.s32.f32 %v279
        %v281 = vmax.f32 %v274, 0.0
        %v282 = vmul.f32 %v274, %v280
        %v283 = vsub.f32 %v281, %v282
        %v284 = vand.u32 2147483647, %v274
        %v285 = vsub.f32 0.0, %v284
        %v286 = vmul.f32 %v285, 1.442695
        %v287 = vpow.pop %v286
        %v288 = vadd.f32 %v287, 1.0
        %v289 = vlog2.pop %v288
        %v290 = vmul.f32 %v289, 0.6931472
        %v291 = vmul.f32 -0.5, %v287
        %v292 = vadd.f32 %v291, 1.0
        %v293 = vmul.f32 %v292, %v287
        %v294 = vand.u32 2147483647, %v287
        %vm295 = vcmp.lt.f32.partialorder %v294, 0.0004427343
        %v296 = vsel %vm295, %v293, %v290
        %v297 = vadd.f32 %v283, %v296
        %v298 = vsub.f32 0.0, %v297
        %v299 = vmul.f32 %v298, 1.442695
        %v300 = vpow.pop %v299
        %v301 = vsel %vm278, 0.25, 0.75
        %v302 = vsub.f32 1.0, %v300
        %v303 = vmul.f32 %v302, %v302
        %v304 = vmul.f32 %v301, %v303
        %v305 = vmul.f32 %v304, %v297
        %v306 = vstv %s250
        %vm307 = vcmp.lt.s32.totalorder %v276, %v306
        %v308 = vsel %vm307, %v305, 0.0
        %309 = vst [vmem:[%s242] sm:$0x1] %v274
        %vm310 = vcmask 1040384
        %v311 = vsel %vm310, %v308, 0.0
        %312 = vadd.xlane.f32.xlu0 %v311
        %v313 = vpop.xlane.xlu0 %312
        %v314 = vrot.slane %v313, 4
        %v315 = vadd.f32 %v313, %v314
        %v316 = vrot.slane %v315, 2
        %v317 = vadd.f32 %v315, %v316
        %v318 = vrot.slane %v317, 1
        %v319 = vadd.f32 %v317, %v318
        %s320 = vtos %v319
        %s321 = sadd.f32 %s320, 0.0
        %vm322 = vcmp.eq.s32.totalorder %v252, 0
        %v323 = vstv %s321
        %v324 = vsel %vm322, %v323, 0.0
        %325 = vst [vmem:[%s248] sm:$0x1] %v324
        %s326 = sand.u32 %s96, 1
        %s327 = scalar_lea.sflag [#allocation6], %s326
        %s328 = sand.u32 %s96, 1
        %s329 = scalar_lea.vmem [#allocation9], %s328
        %s330 = sand.u32 %s122, 1
        %s331 = scalar_lea.sflag [#allocation11], %s330
        %s332 = sand.u32 %s122, 1
        %s333 = scalar_lea.vmem [#allocation10], %s332
        // Predicated region
        $region37: #{tpu_custom_call.1} parent=27 // pred_check
          %p334 = pneg %p106
        $region38: #{tpu_custom_call.1} parent=27 // pred_check_branch
          %336 = sbr.rel (%p334) target = $region40
        $region39: #{tpu_custom_call.1} parent=27 // pred_region
          %338 = vsyncadd %s327, 0
          %s339 = scalar_lea.hbm %s3, %s36
          %s341 = sshll.u32 %s329, 4
          %s342 = int_to_ptr.vmem [resolvable:$true] %s341
          %s343 = sshll.u32 %s339, 4
          %s344 = int_to_ptr.hbm [resolvable:$true] %s343
          %346 = dma.vmem_to_hbm [thread:$0]  %s342, 16, %s344, %s327
        $region40: #{tpu_custom_call.1} parent=27 // pred_fallthru
          _
        // Predicated region
        $region41: #{tpu_custom_call.1} parent=27 // pred_check
          %p347 = pneg %p132
        $region42: #{tpu_custom_call.1} parent=27 // pred_check_branch
          %349 = sbr.rel (%p347) target = $region44
        $region43: #{tpu_custom_call.1} parent=27 // pred_region
          %351 = vsyncadd %s331, 0
          %s352 = scalar_lea.hbm %s4, %s36
          %s354 = sshll.u32 %s333, 4
          %s355 = int_to_ptr.vmem [resolvable:$true] %s354
          %s356 = sshll.u32 %s352, 4
          %s357 = int_to_ptr.hbm [resolvable:$true] %s356
          %359 = dma.vmem_to_hbm [thread:$0]  %s355, 16, %s357, %s331
        $region44: #{tpu_custom_call.1} parent=27 // pred_fallthru
          _
      $region28: #{tpu_custom_call.1} parent=5 // pred_fallthru
        _
      %p360 = scmp.le.s32.totalorder 2, %s31
      // Predicated region
      $region45: #{tpu_custom_call.1} parent=5 // pred_check
        %p361 = pneg %p360
      $region46: #{tpu_custom_call.1} parent=5 // pred_check_branch
        %363 = sbr.rel (%p361) target = $region48
      $region47: #{tpu_custom_call.1} parent=5 // pred_region
        %s364 = ssub.s32 %s31, 2
        // Predicated region
        $region49: #{tpu_custom_call.1} parent=47 // pred_check
          %p365 = pneg %p112
        $region50: #{tpu_custom_call.1} parent=47 // pred_check_branch
          %367 = sbr.rel (%p365) target = $region52
        $region51: #{tpu_custom_call.1} parent=47 // pred_region
          %s368 = sand.u32 %s97, 1
          %s369 = scalar_lea.sflag [#allocation6], %s368
          %s370 = sand.u32 %s97, 1
          %s371 = scalar_lea.vmem [#allocation9], %s370
          %373 = dma.done %s369, 16
        $region52: #{tpu_custom_call.1} parent=47 // pred_fallthru
          _
        // Predicated region
        $region53: #{tpu_custom_call.1} parent=47 // pred_check
          %p374 = pneg %p138
        $region54: #{tpu_custom_call.1} parent=47 // pred_check_branch
          %376 = sbr.rel (%p374) target = $region56
        $region55: #{tpu_custom_call.1} parent=47 // pred_region
          %s377 = sand.u32 %s123, 1
          %s378 = scalar_lea.sflag [#allocation11], %s377
          %s379 = sand.u32 %s123, 1
          %s380 = scalar_lea.vmem [#allocation10], %s379
          %382 = dma.done %s378, 16
        $region56: #{tpu_custom_call.1} parent=47 // pred_fallthru
          _
      $region48: #{tpu_custom_call.1} parent=5 // pred_fallthru
        _
    $region6: #{tpu_custom_call.1} parent=1 // loop_footer
      %s35 = sadd.s32 1, %s31
    $region7: #{tpu_custom_call.1} parent=1 // loop_footer_branch
      %30 = sbr.rel target = $region3
    $region8: #{tpu_custom_call.1} parent=1 // loop_exit
      _
    %383 = vsyncpa [#allocation5], 1
    %s384 = scalar_lea.sflag [#allocation5], 1
    %385 = vsyncpa %s384, 1
    %386 = vsyncpa [#allocation8], 1
    %s387 = scalar_lea.sflag [#allocation8], 1
    %388 = vsyncpa %s387, 1
    %389 = vsyncpa [#allocation6], 1
    %s390 = scalar_lea.sflag [#allocation6], 1
    %391 = vsyncpa %s390, 1
    %392 = vsyncpa [#allocation11], 1
    %s393 = scalar_lea.sflag [#allocation11], 1
    %394 = vsyncpa %s393, 1

</llo_original>
